<compile_context>
chip_gen: v5e
topology: v5e:2x2
jax: 0.10.0
libtpu: 0.0.40
codegen_flags: <defaults>
</compile_context>

<pallas_src>
import math
import jax
import jax.numpy as jnp
from jax.experimental import pallas as pl
from jax.experimental.pallas import tpu as pltpu


def _round_up(v, m):
    return ((v + m - 1) // m) * m


def _vmem_budget_bytes():
    """Scoped-VMEM budget branched on physical VMEM (v5e/v6e vs v7x)."""
    phys = 64 * 1024 * 1024  # conservative default (v7x-sized)
    try:
        phys = int(pltpu.get_tpu_info().vmem_capacity_bytes)
    except Exception:
        pass
    if phys >= 100 * 1024 * 1024:      # v5e / v6e: 128 MiB physical
        return 80 * 1024 * 1024
    return 44 * 1024 * 1024            # v7x: 64 MiB physical


def _pick_t_node(n):
    """Node tile in {128, 256, 512}, minimizing padding (ties -> larger)."""
    if n <= 128:
        return 128
    best_pad, best_t = None, None
    for t in (128, 256, 512):
        pad = _round_up(n, t)
        if best_pad is None or pad < best_pad or (pad == best_pad and t > best_t):
            best_pad, best_t = pad, t
    return best_t


def _pick_t_f(f_out_p, cap):
    """Largest 128-multiple divisor of f_out_p that is <= cap."""
    if f_out_p <= cap:
        return f_out_p
    units = f_out_p // 128
    best = 1
    for d in range(1, units + 1):
        if units % d == 0 and d * 128 <= cap:
            best = d
    return best * 128


# ------------------------------ kernels ----------------------------------- #
def _matmul_fullk_kernel(a_ref, b_ref, o_ref):
    o_ref[...] = jnp.dot(
        a_ref[...], b_ref[...], preferred_element_type=jnp.float32
    ).astype(o_ref.dtype)


def _matmul_kacc_kernel(a_ref, b_ref, o_ref, acc_ref):
    k = pl.program_id(2)

    @pl.when(k == 0)
    def _():
        acc_ref[...] = jnp.zeros_like(acc_ref)

    acc_ref[...] += jnp.dot(
        a_ref[...], b_ref[...], preferred_element_type=jnp.float32
    )

    @pl.when(k == pl.num_programs(2) - 1)
    def _():
        o_ref[...] = acc_ref[...].astype(o_ref.dtype)


def _agg_panel_kernel(adj_ref, xw_ref, o_ref):
    # adj_ref: (t_node, n_pad), xw_ref: (n_pad, t_f), o_ref: (t_node, t_f).
    # Full contraction in one MXU dot: no accumulator traffic, no k axis.
    o_ref[...] = jnp.dot(
        adj_ref[...], xw_ref[...], preferred_element_type=jnp.float32
    ).astype(o_ref.dtype)


def _agg_kacc_kernel(adj_ref, xw_ref, o_ref, acc_ref):
    k = pl.program_id(3)

    @pl.when(k == 0)
    def _():
        acc_ref[...] = jnp.zeros_like(acc_ref)

    acc_ref[...] += jnp.dot(
        adj_ref[...], xw_ref[...], preferred_element_type=jnp.float32
    )

    @pl.when(k == pl.num_programs(3) - 1)
    def _():
        o_ref[...] = acc_ref[...].astype(o_ref.dtype)


# --------------------------- Phase 1: x @ W -------------------------------- #
def _linear_xw(x2d, wp, cdt, budget):
    m_rows, f_in = x2d.shape
    _, f_out_p = wp.shape
    isz = jnp.dtype(cdt).itemsize
    plan = int(budget * 0.9)

    # m_rows is always a multiple of 128 (node padding), so never a tiny tile.
    t_m1 = 256 if m_rows % 256 == 0 else 128
    t_f = _pick_t_f(f_out_p, cap=1024)

    full_k_ok = 2 * ((t_m1 + t_f) * f_in * isz + t_m1 * t_f * isz) <= plan
    if full_k_ok:
        grid = (m_rows // t_m1, f_out_p // t_f)
        cost = pl.CostEstimate(
            flops=int(2 * m_rows * f_in * f_out_p),
            transcendentals=0,
            bytes_accessed=int(
                ((f_out_p // t_f) * m_rows * f_in
                 + (m_rows // t_m1) * f_in * f_out_p
                 + m_rows * f_out_p) * isz),
        )
        return pl.pallas_call(
            _matmul_fullk_kernel,
            out_shape=jax.ShapeDtypeStruct((m_rows, f_out_p), cdt),
            grid_spec=pltpu.PrefetchScalarGridSpec(
                num_scalar_prefetch=0,
                grid=grid,
                in_specs=[
                    pl.BlockSpec((t_m1, f_in), lambda i, j: (i, 0)),
                    pl.BlockSpec((f_in, t_f), lambda i, j: (0, j)),
                ],
                out_specs=pl.BlockSpec((t_m1, t_f), lambda i, j: (i, j)),
            ),
            compiler_params=pltpu.CompilerParams(
                dimension_semantics=("parallel", "parallel"),
                vmem_limit_bytes=budget,
            ),
            cost_estimate=cost,
        )(x2d, wp)

    # Wide-feature fallback: tile F_in with an f32 accumulator.
    t_k = 512
    f_in_p = _round_up(f_in, t_k)
    if f_in_p != f_in:
        x2d = jnp.pad(x2d, ((0, 0), (0, f_in_p - f_in)))
        wp = jnp.pad(wp, ((0, f_in_p - f_in), (0, 0)))
    grid = (m_rows // t_m1, f_out_p // t_f, f_in_p // t_k)
    cost = pl.CostEstimate(
        flops=int(2 * m_rows * f_in_p * f_out_p),
        transcendentals=0,
        bytes_accessed=int(
            ((f_out_p // t_f) * m_rows * f_in_p
             + (m_rows // t_m1) * f_in_p * f_out_p
             + m_rows * f_out_p) * isz),
    )
    return pl.pallas_call(
        _matmul_kacc_kernel,
        out_shape=jax.ShapeDtypeStruct((m_rows, f_out_p), cdt),
        grid_spec=pltpu.PrefetchScalarGridSpec(
            num_scalar_prefetch=0,
            grid=grid,
            in_specs=[
                pl.BlockSpec((t_m1, t_k), lambda i, j, k: (i, k)),
                pl.BlockSpec((t_k, t_f), lambda i, j, k: (k, j)),
            ],
            out_specs=pl.BlockSpec((t_m1, t_f), lambda i, j, k: (i, j)),
            scratch_shapes=[pltpu.VMEM((t_m1, t_f), jnp.float32)],
        ),
        compiler_params=pltpu.CompilerParams(
            dimension_semantics=("parallel", "parallel", "arbitrary"),
            vmem_limit_bytes=budget,
        ),
        cost_estimate=cost,
    )(x2d, wp)


# ------------------------- Phase 2: adj @ xw[b] ----------------------------- #
def _aggregate(adjp, xw3, out_dtype, budget):
    B, n_pad, f_out_p = xw3.shape
    isz = jnp.dtype(xw3.dtype).itemsize
    out_isz = jnp.dtype(out_dtype).itemsize
    plan = int(budget * 0.9)

    # Path A: collapse the contraction axis.  adj row-panel (t_node, n_pad) +
    # xw panel (n_pad, t_f) both VMEM-resident, grid (row_tile, batch, f_tile)
    # with the adjacency index stationary across batch/F_out -> adj streamed
    # from HBM exactly once, one dot per output tile, no accumulator.
    t_f_pref = _pick_t_f(f_out_p, cap=2048)
    tn_cands = [t for t in (n_pad, 512, 256, 128) if t <= n_pad and n_pad % t == 0]
    tn_cands = list(dict.fromkeys(tn_cands))
    tf_cands = [t for t in (t_f_pref, 1024, 512, 256, 128)
                if t <= t_f_pref and f_out_p % t == 0]
    tf_cands = list(dict.fromkeys(tf_cands))

    plan_a = None
    for tn in tn_cands:            # bigger row panel first: fewer xw re-reads
        for tf in tf_cands:        # bigger F_out tile first: fewer grid steps
            need = 2 * ((tn * n_pad + n_pad * tf) * isz + tn * tf * out_isz)
            if need <= plan:
                plan_a = (tn, tf)
                break
        if plan_a is not None:
            break

    if plan_a is not None:
        t_node, t_f = plan_a
        grid = (n_pad // t_node, B, f_out_p // t_f)
        cost = pl.CostEstimate(
            flops=int(2 * B * n_pad * n_pad * f_out_p),
            transcendentals=0,
            bytes_accessed=int(
                n_pad * n_pad * isz
                + (n_pad // t_node) * B * n_pad * f_out_p * isz
                + B * n_pad * f_out_p * out_isz),
        )
        return pl.pallas_call(
            _agg_panel_kernel,
            out_shape=jax.ShapeDtypeStruct((B, n_pad, f_out_p), out_dtype),
            grid_spec=pltpu.PrefetchScalarGridSpec(
                num_scalar_prefetch=0,
                grid=grid,
                in_specs=[
                    pl.BlockSpec((t_node, n_pad), lambda i, b, j: (i, 0)),
                    pl.BlockSpec((None, n_pad, t_f), lambda i, b, j: (b, 0, j)),
                ],
                out_specs=pl.BlockSpec(
                    (None, t_node, t_f), lambda i, b, j: (b, i, j)),
            ),
            compiler_params=pltpu.CompilerParams(
                dimension_semantics=("parallel", "parallel", "parallel"),
                vmem_limit_bytes=budget,
            ),
            cost_estimate=cost,
        )(adjp, xw3)

    # Path B (only for very large N where full-K panels cannot fit): k-tiled
    # accumulation with the adjacency row-tile index outermost.
    # TODO(synk): for huge N, reuse each adj tile across the batch in-kernel
    # (B-chunked xw block) to cut adjacency HBM reads by another factor of B.
    t_node = max(t for t in (128, 256, 512) if n_pad % t == 0)
    t_f = 128
    for tf in (1024, 512, 256, 128):
        if f_out_p % tf != 0:
            continue
        need = (2 * (t_node * t_node + t_node * tf) * isz
                + 2 * t_node * tf * out_isz + t_node * tf * 4)
        if need <= plan:
            t_f = tf
            break
    grid = (n_pad // t_node, B, f_out_p // t_f, n_pad // t_node)
    cost = pl.CostEstimate(
        flops=int(2 * B * n_pad * n_pad * f_out_p),
        transcendentals=0,
        bytes_accessed=int(
            B * (f_out_p // t_f) * n_pad * n_pad * isz
            + (n_pad // t_node) * B * n_pad * f_out_p * isz
            + B * n_pad * f_out_p * out_isz),
    )
    return pl.pallas_call(
        _agg_kacc_kernel,
        out_shape=jax.ShapeDtypeStruct((B, n_pad, f_out_p), out_dtype),
        grid_spec=pltpu.PrefetchScalarGridSpec(
            num_scalar_prefetch=0,
            grid=grid,
            in_specs=[
                pl.BlockSpec((t_node, t_node), lambda i, b, j, k: (i, k)),
                pl.BlockSpec((None, t_node, t_f), lambda i, b, j, k: (b, k, j)),
            ],
            out_specs=pl.BlockSpec(
                (None, t_node, t_f), lambda i, b, j, k: (b, i, j)),
            scratch_shapes=[pltpu.VMEM((t_node, t_f), jnp.float32)],
        ),
        compiler_params=pltpu.CompilerParams(
            dimension_semantics=("parallel", "parallel", "parallel", "arbitrary"),
            vmem_limit_bytes=budget,
        ),
        cost_estimate=cost,
    )(adjp, xw3)


# ------------------------------ public API --------------------------------- #
def graph_convolution(x, weight, adj, *, mxu_dtype=None):
    """GCN forward: adj @ (x @ weight).

    x: (B, N, F_in); weight: (F_in, F_out); adj: (N, N) shared over the batch.
    Returns (B, N, F_out) in x.dtype.  Pass mxu_dtype=jnp.bfloat16 on v6e/v7x
    for the fast bf16 MXU path and halved HBM traffic (accumulation stays
    float32; expect bf16-level agreement with an f32 reference).
    """
    out_dtype = x.dtype
    B, N, F_in = x.shape
    F_in_w, F_out = weight.shape
    assert F_in_w == F_in and adj.shape == (N, N)
    # TODO(synk): batched adjacency (B, N, N) not supported; the PyTorch module
    # stores a single shared adj, which is what is implemented here.

    cdt = jnp.dtype(mxu_dtype) if mxu_dtype is not None else jnp.dtype(x.dtype)
    budget = _vmem_budget_bytes()

    # Lane-dense padding: node and F_out dims to multiples of 128.
    t_node0 = _pick_t_node(N)
    n_pad = _round_up(N, t_node0)
    f_out_p = _round_up(F_out, 128)

    xp = x.astype(cdt)
    if n_pad != N:
        xp = jnp.pad(xp, ((0, 0), (0, n_pad - N), (0, 0)))
    wp = weight.astype(cdt)
    if f_out_p != F_out:
        wp = jnp.pad(wp, ((0, 0), (0, f_out_p - F_out)))
    adjp = adj.astype(cdt)
    if n_pad != N:
        adjp = jnp.pad(adjp, ((0, n_pad - N), (0, n_pad - N)))

    # Phase 1: one tall matmul over the flattened batch.
    x2d = xp.reshape(B * n_pad, F_in)
    xw = _linear_xw(x2d, wp, cdt, budget)
    xw3 = xw.reshape(B, n_pad, f_out_p)

    # Phase 2: neighborhood aggregation with the shared adjacency.
    out_p = _aggregate(adjp, xw3, out_dtype, budget)
    return out_p[:, :N, :F_out]


if __name__ == "__main__":
    # Small deterministic shapes consistent with the module's forward.
    B, N = 2, 16          # batch, number of graph nodes
    F_in, F_out = 32, 32  # in_channels, out_channels

    key = jax.random.PRNGKey(0)
    k_x, k_adj, k_w = jax.random.split(key, 3)

    x = jax.random.normal(k_x, (B, N, F_in), dtype=jnp.float32)
    adj = jax.random.uniform(k_adj, (N, N), dtype=jnp.float32)

    # init_parameters(): weight ~ U(-stdv, stdv), stdv = 1/sqrt(out_size)
    stdv = 1.0 / math.sqrt(F_out)
    weight = jax.random.uniform(
        k_w, (F_in, F_out), dtype=jnp.float32, minval=-stdv, maxval=stdv
    )

    # Pure-JAX reference (same math as the PyTorch forward).
    ref = jnp.matmul(adj, jnp.matmul(x, weight))

    out = jax.block_until_ready(graph_convolution(x, weight, adj))
    assert out.shape == (B, N, F_out)
    assert jnp.allclose(out, ref, atol=1e-4, rtol=1e-4)

    # Recommended fast path on v6e/v7x: bf16 operands, f32 accumulation.
    out_bf16 = jax.block_until_ready(
        graph_convolution(x, weight, adj, mxu_dtype=jnp.bfloat16))
    assert out_bf16.shape == (B, N, F_out)
    assert jnp.allclose(out_bf16, ref, atol=1e-1, rtol=1e-1)  # bf16 rounding

    print("KERNEL_OK")
</pallas_src>

<mosaic_0001>
module attributes {stable_mosaic.version = 11 : i64} {
  func.func @_matmul_fullk_kernel(%arg0: i32, %arg1: i32, %arg2: memref<256x32xf32, #tpu.memory_space<vmem>>, %arg3: memref<32x128xf32, #tpu.memory_space<vmem>>, %arg4: memref<256x128xf32, #tpu.memory_space<vmem>>) attributes {dimension_semantics = [#tpu.dimension_semantics<parallel>, #tpu.dimension_semantics<parallel>], iteration_bounds = array<i64: 1, 1>, scalar_prefetch = 0 : i64, scratch_operands = 0 : i64, tpu.core_type = #tpu.core_type<tc>, window_params = [{transform_indices = @transform_0, window_bounds = array<i64: 256, 32>}, {transform_indices = @transform_1, window_bounds = array<i64: 32, 128>}, {transform_indices = @transform_2, window_bounds = array<i64: 256, 128>}]} {
    %c0 = arith.constant 0 : index
    %c0_0 = arith.constant 0 : index
    %0 = vector.load %arg2[%c0, %c0_0] : memref<256x32xf32, #tpu.memory_space<vmem>>, vector<256x32xf32>
    %c0_1 = arith.constant 0 : index
    %c0_2 = arith.constant 0 : index
    %1 = vector.load %arg3[%c0_1, %c0_2] : memref<32x128xf32, #tpu.memory_space<vmem>>, vector<32x128xf32>
    %cst = arith.constant dense<0.000000e+00> : vector<256x128xf32>
    %2 = tpu.matmul %0, %1, %cst {dimension_numbers = #tpu.dot_dimension_numbers<[1], [0], [0], [1], [0, 0, 1, 1], [], []>} : vector<256x32xf32>, vector<32x128xf32>, vector<256x128xf32> -> vector<256x128xf32>
    %c0_3 = arith.constant 0 : index
    %c0_4 = arith.constant 0 : index
    %3 = vector.load %arg4[%c0_3, %c0_4] : memref<256x128xf32, #tpu.memory_space<vmem>>, vector<256x128xf32>
    tpu.vector_store %arg4[%c0_3, %c0_4], %2 {strides = array<i32>} : memref<256x128xf32, #tpu.memory_space<vmem>>, vector<256x128xf32>,
    return
  }
  func.func @transform_0(%arg0: i32, %arg1: i32) -> (i32, i32) {
    %c0_i32 = arith.constant 0 : i32
    %c0_i32_0 = arith.constant 0 : i32
    return %arg0, %c0_i32 : i32, i32
  }
  func.func @transform_1(%arg0: i32, %arg1: i32) -> (i32, i32) {
    %c0_i32 = arith.constant 0 : i32
    %c0_i32_0 = arith.constant 0 : i32
    return %c0_i32, %arg1 : i32, i32
  }
  func.func @transform_2(%arg0: i32, %arg1: i32) -> (i32, i32) {
    %c0_i32 = arith.constant 0 : i32
    return %arg0, %arg1 : i32, i32
  }
}

</mosaic_0001>

<llo_original>
// kernel: tpu_custom_call.1
$region0: #{tpu_custom_call.1}
  #allocation0 [shape = 'u32[]', space=smem, size = 0x4, offset = 0x4, fixed_abs, tag = 'smem constant byte address 0x4 - core index']
  #allocation1 [shape = 'u32[72,128]{1,0:T(1,128)}', space=vmem, size = 0x9000, scoped, tag = 'internal scratch']
  %s0 = inlined_call_operand.vmem [shape: f32[256,32], index: 0, kind: input, shape index: {}]
  %s1 = inlined_call_operand.vmem [shape: f32[32,128], index: 1, kind: input, shape index: {}]
  %s2 = inlined_call_operand.hbm [shape: f32[256,128], index: 2, kind: output, shape index: {}]
  %s3 = sld [smem:[#allocation0]]
  $region18: #{tpu_custom_call.1} parent=0
    _
  %s5 = ssub.s32 1, %s3
  %s6 = scalar_select 0, %s5, %s3
  $region1: #{tpu_custom_call.1} parent=0
    #allocation2 [shape = 'u8[131072]{0}', space=vmem, size = 0x20000, scoped, tag = 'output window, operand 0, single buffered']
    #allocation3 [shape = 's32[1]{0}', space=sflag, size = 0x4, scoped, tag = 'scoped memory for tpu_custom_call.1']
    %7 = vsyncpa [#allocation3], 0
    // Predicated region
    $region2: #{tpu_custom_call.1} parent=1 // pred_check
      _
    $region3: #{tpu_custom_call.1} parent=1 // pred_check_branch
      %9 = sbr.rel (0) target = $region5
    $region4: #{tpu_custom_call.1} parent=1 // pred_region
      _
    $region5: #{tpu_custom_call.1} parent=1 // pred_fallthru
      _
    // Predicated region
    $region6: #{tpu_custom_call.1} parent=1 // pred_check
      _
    $region7: #{tpu_custom_call.1} parent=1 // pred_check_branch
      %11 = sbr.rel (0) target = $region9
    $region8: #{tpu_custom_call.1} parent=1 // pred_region
      _
    $region9: #{tpu_custom_call.1} parent=1 // pred_fallthru
      _
    %v12 = vld [vmem:[%s0] sm:$0xff]
    %v13 = vld [vmem:[%s0 + $0x8] sm:$0xff]
    %v14 = vld [vmem:[%s0 + $0x10] sm:$0xff]
    %v15 = vld [vmem:[%s0 + $0x18] sm:$0xff]
    %v16 = vld [vmem:[%s0 + $0x20] sm:$0xff]
    %v17 = vld [vmem:[%s0 + $0x28] sm:$0xff]
    %v18 = vld [vmem:[%s0 + $0x30] sm:$0xff]
    %v19 = vld [vmem:[%s0 + $0x38] sm:$0xff]
    %v20 = vld [vmem:[%s0 + $0x40] sm:$0xff]
    %v21 = vld [vmem:[%s0 + $0x48] sm:$0xff]
    %v22 = vld [vmem:[%s0 + $0x50] sm:$0xff]
    %v23 = vld [vmem:[%s0 + $0x58] sm:$0xff]
    %v24 = vld [vmem:[%s0 + $0x60] sm:$0xff]
    %v25 = vld [vmem:[%s0 + $0x68] sm:$0xff]
    %v26 = vld [vmem:[%s0 + $0x70] sm:$0xff]
    %v27 = vld [vmem:[%s0 + $0x78] sm:$0xff]
    %v28 = vld [vmem:[%s0 + $0x80] sm:$0xff]
    %v29 = vld [vmem:[%s0 + $0x88] sm:$0xff]
    %v30 = vld [vmem:[%s0 + $0x90] sm:$0xff]
    %v31 = vld [vmem:[%s0 + $0x98] sm:$0xff]
    %v32 = vld [vmem:[%s0 + $0xa0] sm:$0xff]
    %v33 = vld [vmem:[%s0 + $0xa8] sm:$0xff]
    %v34 = vld [vmem:[%s0 + $0xb0] sm:$0xff]
    %v35 = vld [vmem:[%s0 + $0xb8] sm:$0xff]
    %v36 = vld [vmem:[%s0 + $0xc0] sm:$0xff]
    %v37 = vld [vmem:[%s0 + $0xc8] sm:$0xff]
    %v38 = vld [vmem:[%s0 + $0xd0] sm:$0xff]
    %v39 = vld [vmem:[%s0 + $0xd8] sm:$0xff]
    %v40 = vld [vmem:[%s0 + $0xe0] sm:$0xff]
    %v41 = vld [vmem:[%s0 + $0xe8] sm:$0xff]
    %v42 = vld [vmem:[%s0 + $0xf0] sm:$0xff]
    %v43 = vld [vmem:[%s0 + $0xf8] sm:$0xff]
    %v44 = vld [vmem:[%s1] sm:$0xff]
    %v45 = vld [vmem:[%s1 + $0x8] sm:$0xff]
    %v46 = vld [vmem:[%s1 + $0x10] sm:$0xff]
    %v47 = vld [vmem:[%s1 + $0x18] sm:$0xff]
    %vm48 = vcmask 261120
    %v50 = vsel %vm48, %v12, 0
    %v53 = vsel %vm48, %v13, 0
    %v56 = vsel %vm48, %v14, 0
    %v59 = vsel %vm48, %v15, 0
    %v62 = vsel %vm48, %v16, 0
    %v65 = vsel %vm48, %v17, 0
    %v68 = vsel %vm48, %v18, 0
    %v71 = vsel %vm48, %v19, 0
    %v74 = vsel %vm48, %v20, 0
    %v77 = vsel %vm48, %v21, 0
    %v80 = vsel %vm48, %v22, 0
    %v83 = vsel %vm48, %v23, 0
    %v86 = vsel %vm48, %v24, 0
    %v89 = vsel %vm48, %v25, 0
    %v92 = vsel %vm48, %v26, 0
    %v95 = vsel %vm48, %v27, 0
    %v98 = vsel %vm48, %v28, 0
    %v101 = vsel %vm48, %v29, 0
    %v104 = vsel %vm48, %v30, 0
    %v107 = vsel %vm48, %v31, 0
    %v110 = vsel %vm48, %v32, 0
    %v113 = vsel %vm48, %v33, 0
    %v116 = vsel %vm48, %v34, 0
    %v119 = vsel %vm48, %v35, 0
    %v122 = vsel %vm48, %v36, 0
    %v125 = vsel %vm48, %v37, 0
    %v128 = vsel %vm48, %v38, 0
    %v131 = vsel %vm48, %v39, 0
    %v134 = vsel %vm48, %v40, 0
    %v137 = vsel %vm48, %v41, 0
    %v140 = vsel %vm48, %v42, 0
    %v143 = vsel %vm48, %v43, 0
    %145 = vmatpush.msra.mxu0 0.0
    %146 = vmatpush.msra.mxu0 0.0
    %147 = vmatpush.msra.mxu0 0.0
    %148 = vmatpush.msra.mxu0 0.0
    %149 = vmatpush.msra.mxu0 0.0
    %150 = vmatpush.msra.mxu0 0.0
    %151 = vmatpush.msra.mxu0 0.0
    %152 = vmatpush.msra.mxu0 0.0
    %153 = vmatpush.msra.mxu0 0.0
    %154 = vmatpush.msra.mxu0 0.0
    %155 = vmatpush.msra.mxu0 0.0
    %156 = vmatpush.msra.mxu0 0.0
    %157 = vmatpush.msra.mxu0 %v47
    %158 = vmatpush.msra.mxu0 %v46
    %159 = vmatpush.msra.mxu0 %v45
    %160 = vmatpush.msra.mxu0 %v44
    %161 = vmatmul.f32.gmra.mxu0 %v50
    %v162 = vpop.f32.mrf.mxu0
    %v163 = vadd.f32 0.0, %v162
    %164 = vmatmul.f32.gmra.mxu0 %v53
    %v165 = vpop.f32.mrf.mxu0
    %v166 = vadd.f32 0.0, %v165
    %167 = vmatmul.f32.gmra.mxu0 %v56
    %v168 = vpop.f32.mrf.mxu0
    %v169 = vadd.f32 0.0, %v168
    %170 = vmatmul.f32.gmra.mxu0 %v59
    %v171 = vpop.f32.mrf.mxu0
    %v172 = vadd.f32 0.0, %v171
    %173 = vmatmul.f32.gmra.mxu0 %v62
    %v174 = vpop.f32.mrf.mxu0
    %v175 = vadd.f32 0.0, %v174
    %176 = vmatmul.f32.gmra.mxu0 %v65
    %v177 = vpop.f32.mrf.mxu0
    %v178 = vadd.f32 0.0, %v177
    %179 = vmatmul.f32.gmra.mxu0 %v68
    %v180 = vpop.f32.mrf.mxu0
    %v181 = vadd.f32 0.0, %v180
    %182 = vmatmul.f32.gmra.mxu0 %v71
    %v183 = vpop.f32.mrf.mxu0
    %v184 = vadd.f32 0.0, %v183
    %185 = vmatmul.f32.gmra.mxu0 %v74
    %v186 = vpop.f32.mrf.mxu0
    %v187 = vadd.f32 0.0, %v186
    %188 = vmatmul.f32.gmra.mxu0 %v77
    %v189 = vpop.f32.mrf.mxu0
    %v190 = vadd.f32 0.0, %v189
    %191 = vmatmul.f32.gmra.mxu0 %v80
    %v192 = vpop.f32.mrf.mxu0
    %v193 = vadd.f32 0.0, %v192
    %194 = vmatmul.f32.gmra.mxu0 %v83
    %v195 = vpop.f32.mrf.mxu0
    %v196 = vadd.f32 0.0, %v195
    %197 = vmatmul.f32.gmra.mxu0 %v86
    %v198 = vpop.f32.mrf.mxu0
    %v199 = vadd.f32 0.0, %v198
    %200 = vmatmul.f32.gmra.mxu0 %v89
    %v201 = vpop.f32.mrf.mxu0
    %v202 = vadd.f32 0.0, %v201
    %203 = vmatmul.f32.gmra.mxu0 %v92
    %v204 = vpop.f32.mrf.mxu0
    %v205 = vadd.f32 0.0, %v204
    %206 = vmatmul.f32.gmra.mxu0 %v95
    %v207 = vpop.f32.mrf.mxu0
    %v208 = vadd.f32 0.0, %v207
    %209 = vmatmul.f32.gmra.mxu0 %v98
    %v210 = vpop.f32.mrf.mxu0
    %v211 = vadd.f32 0.0, %v210
    %212 = vmatmul.f32.gmra.mxu0 %v101
    %v213 = vpop.f32.mrf.mxu0
    %v214 = vadd.f32 0.0, %v213
    %215 = vmatmul.f32.gmra.mxu0 %v104
    %v216 = vpop.f32.mrf.mxu0
    %v217 = vadd.f32 0.0, %v216
    %218 = vmatmul.f32.gmra.mxu0 %v107
    %v219 = vpop.f32.mrf.mxu0
    %v220 = vadd.f32 0.0, %v219
    %221 = vmatmul.f32.gmra.mxu0 %v110
    %v222 = vpop.f32.mrf.mxu0
    %v223 = vadd.f32 0.0, %v222
    %224 = vmatmul.f32.gmra.mxu0 %v113
    %v225 = vpop.f32.mrf.mxu0
    %v226 = vadd.f32 0.0, %v225
    %227 = vmatmul.f32.gmra.mxu0 %v116
    %v228 = vpop.f32.mrf.mxu0
    %v229 = vadd.f32 0.0, %v228
    %230 = vmatmul.f32.gmra.mxu0 %v119
    %v231 = vpop.f32.mrf.mxu0
    %v232 = vadd.f32 0.0, %v231
    %233 = vmatmul.f32.gmra.mxu0 %v122
    %v234 = vpop.f32.mrf.mxu0
    %v235 = vadd.f32 0.0, %v234
    %236 = vmatmul.f32.gmra.mxu0 %v125
    %v237 = vpop.f32.mrf.mxu0
    %v238 = vadd.f32 0.0, %v237
    %239 = vmatmul.f32.gmra.mxu0 %v128
    %v240 = vpop.f32.mrf.mxu0
    %v241 = vadd.f32 0.0, %v240
    %242 = vmatmul.f32.gmra.mxu0 %v131
    %v243 = vpop.f32.mrf.mxu0
    %v244 = vadd.f32 0.0, %v243
    %245 = vmatmul.f32.gmra.mxu0 %v134
    %v246 = vpop.f32.mrf.mxu0
    %v247 = vadd.f32 0.0, %v246
    %248 = vmatmul.f32.gmra.mxu0 %v137
    %v249 = vpop.f32.mrf.mxu0
    %v250 = vadd.f32 0.0, %v249
    %251 = vmatmul.f32.gmra.mxu0 %v140
    %v252 = vpop.f32.mrf.mxu0
    %v253 = vadd.f32 0.0, %v252
    %254 = vmatmul.f32.gmra.mxu0 %v143
    %v255 = vpop.f32.mrf.mxu0
    %v256 = vadd.f32 0.0, %v255
    %257 = vdwg.mxu0
    %258 = vst [vmem:[#allocation2] sm:$0xff] %v163
    %259 = vst [vmem:[#allocation2 + $0x8] sm:$0xff] %v166
    %260 = vst [vmem:[#allocation2 + $0x10] sm:$0xff] %v169
    %261 = vst [vmem:[#allocation2 + $0x18] sm:$0xff] %v172
    %262 = vst [vmem:[#allocation2 + $0x20] sm:$0xff] %v175
    %263 = vst [vmem:[#allocation2 + $0x28] sm:$0xff] %v178
    %264 = vst [vmem:[#allocation2 + $0x30] sm:$0xff] %v181
    %265 = vst [vmem:[#allocation2 + $0x38] sm:$0xff] %v184
    %266 = vst [vmem:[#allocation2 + $0x40] sm:$0xff] %v187
    %267 = vst [vmem:[#allocation2 + $0x48] sm:$0xff] %v190
    %268 = vst [vmem:[#allocation2 + $0x50] sm:$0xff] %v193
    %269 = vst [vmem:[#allocation2 + $0x58] sm:$0xff] %v196
    %270 = vst [vmem:[#allocation2 + $0x60] sm:$0xff] %v199
    %271 = vst [vmem:[#allocation2 + $0x68] sm:$0xff] %v202
    %272 = vst [vmem:[#allocation2 + $0x70] sm:$0xff] %v205
    %273 = vst [vmem:[#allocation2 + $0x78] sm:$0xff] %v208
    %274 = vst [vmem:[#allocation2 + $0x80] sm:$0xff] %v211
    %275 = vst [vmem:[#allocation2 + $0x88] sm:$0xff] %v214
    %276 = vst [vmem:[#allocation2 + $0x90] sm:$0xff] %v217
    %277 = vst [vmem:[#allocation2 + $0x98] sm:$0xff] %v220
    %278 = vst [vmem:[#allocation2 + $0xa0] sm:$0xff] %v223
    %279 = vst [vmem:[#allocation2 + $0xa8] sm:$0xff] %v226
    %280 = vst [vmem:[#allocation2 + $0xb0] sm:$0xff] %v229
    %281 = vst [vmem:[#allocation2 + $0xb8] sm:$0xff] %v232
    %282 = vst [vmem:[#allocation2 + $0xc0] sm:$0xff] %v235
    %283 = vst [vmem:[#allocation2 + $0xc8] sm:$0xff] %v238
    %284 = vst [vmem:[#allocation2 + $0xd0] sm:$0xff] %v241
    %285 = vst [vmem:[#allocation2 + $0xd8] sm:$0xff] %v244
    %286 = vst [vmem:[#allocation2 + $0xe0] sm:$0xff] %v247
    %287 = vst [vmem:[#allocation2 + $0xe8] sm:$0xff] %v250
    %288 = vst [vmem:[#allocation2 + $0xf0] sm:$0xff] %v253
    %289 = vst [vmem:[#allocation2 + $0xf8] sm:$0xff] %v256
    // Predicated region
    $region10: #{tpu_custom_call.1} parent=1 // pred_check
      _
    $region11: #{tpu_custom_call.1} parent=1 // pred_check_branch
      %291 = sbr.rel (0) target = $region13
    $region12: #{tpu_custom_call.1} parent=1 // pred_region
      %293 = vsyncadd [#allocation3], 0
      %s294 = sshll.u32 [#allocation2], 4
      %s295 = int_to_ptr.vmem [resolvable:$true] %s294
      %s296 = sshll.u32 %s2, 4
      %s297 = int_to_ptr.hbm [resolvable:$true] %s296
      %302 = dma.vmem_to_hbm [thread:$0]  %s295, 4096, %s297, [#allocation3], 128, 128, 8
    $region13: #{tpu_custom_call.1} parent=1 // pred_fallthru
      _
    // Predicated region
    $region14: #{tpu_custom_call.1} parent=1 // pred_check
      _
    $region15: #{tpu_custom_call.1} parent=1 // pred_check_branch
      %304 = sbr.rel (0) target = $region17
    $region16: #{tpu_custom_call.1} parent=1 // pred_region
      %306 = dma.done [#allocation3], 4096
    $region17: #{tpu_custom_call.1} parent=1 // pred_fallthru
      _
    %307 = vsyncpa [#allocation3], 1

</llo_original>
